<compile_context>
chip_gen: v6e
topology: v6e:2x2x1
jax: 0.10.0
libtpu: 0.0.40
codegen_flags: <defaults>
</compile_context>

<pallas_src>
import math

import jax
import jax.numpy as jnp
from jax.experimental import pallas as pl
from jax.experimental.pallas import tpu as pltpu


def _round_up(n, m):
    return ((n + m - 1) // m) * m


# ----------------------------------------------------------------------------
# Kernels (transposed / batch-on-lanes layout)
# ----------------------------------------------------------------------------
def _mlp_head(xT, w1, b1, w2, b2):
    """exp(w2 @ SiLU(w1 @ xT + b1) + b2)  ->  (OUT, TB), f32.

    xT: (IN, TB) bf16/f32, w1: (HID, IN) bf16/f32, b1: (HID, 1) f32,
    w2: (OUT, HID) f32, b2: (OUT, 1) f32.
    """
    z = jnp.dot(w1, xT, preferred_element_type=jnp.float32) + b1   # (HID, TB) f32
    z = z * jax.nn.sigmoid(z)                                      # SiLU in f32 (EUP)
    y = jnp.dot(w2, z, preferred_element_type=jnp.float32) + b2    # (OUT, TB) f32
    return jnp.exp(y)


def mlp_exp_kernel(xT_ref, w1_ref, b1_ref, w2_ref, b2_ref, o_ref):
    o_ref[...] = _mlp_head(xT_ref[...], w1_ref[...], b1_ref[...],
                           w2_ref[...], b2_ref[...])


def mlp_exp_gamma_kernel(xT_ref, w1_ref, b1_ref, w2_ref, b2_ref,
                         gw1_ref, gb1_ref, gw2_ref, gb2_ref,
                         o_ref, g_ref):
    # Fused main + gamma heads on the same resident x tile (single HBM pass).
    xT = xT_ref[...]
    o_ref[...] = _mlp_head(xT, w1_ref[...], b1_ref[...], w2_ref[...], b2_ref[...])
    g_ref[...] = _mlp_head(xT, gw1_ref[...], gb1_ref[...], gw2_ref[...], gb2_ref[...])


# ----------------------------------------------------------------------------
# Wrapper
# ----------------------------------------------------------------------------
def bdw_mlp(x, w1, b1, w2, b2, gamma_params=None, *,
            tile_b=2048, input_dtype=jnp.bfloat16):
    """Fused  exp(SiLU(x @ w1.T + b1) @ w2.T + b2)  (and optional gamma head).

    gamma_params, if given, is (gw1_expanded(GHID, IN), gb1, gw2(1, GHID), gb2)
    with the gamma first-layer weight already scatter-expanded to the full
    feature axis (zeros at non-selected feature columns), so the gamma head is
    mathematically identical to gathering x[:, gamma_cols] first.

    Returns (B, OUT) [and (B, 1) gamma] in float32.
    """
    B, IN = x.shape
    HID = w1.shape[0]
    OUT = w2.shape[0]

    # Lane-multiple tile, padded batch (padded columns are zero and sliced off).
    tb = _round_up(min(tile_b, _round_up(B, 128)), 128)
    Bp = _round_up(B, tb)

    xT = x.T.astype(input_dtype)                      # (IN, B) — batch on lanes
    if Bp != B:
        xT = jnp.pad(xT, ((0, 0), (0, Bp - B)))

    w1c = w1.astype(input_dtype)                      # (HID, IN): bf16 MXU path
    b1c = b1.reshape(HID, 1).astype(jnp.float32)
    w2c = w2.astype(jnp.float32)                      # tiny & resident; keep f32
    b2c = b2.reshape(OUT, 1).astype(jnp.float32)

    grid = (Bp // tb,)
    x_spec = pl.BlockSpec((IN, tb), lambda i: (0, i))
    w_specs = [
        pl.BlockSpec((HID, IN), lambda i: (0, 0)),
        pl.BlockSpec((HID, 1), lambda i: (0, 0)),
        pl.BlockSpec((OUT, HID), lambda i: (0, 0)),
        pl.BlockSpec((OUT, 1), lambda i: (0, 0)),
    ]
    out_spec = pl.BlockSpec((OUT, tb), lambda i: (0, i))   # lane-dense stores
    cparams = pltpu.CompilerParams(dimension_semantics=("parallel",))

    if gamma_params is None:
        outT = pl.pallas_call(
            mlp_exp_kernel,
            out_shape=jax.ShapeDtypeStruct((OUT, Bp), jnp.float32),
            grid_spec=pltpu.PrefetchScalarGridSpec(
                num_scalar_prefetch=0,
                grid=grid,
                in_specs=[x_spec] + w_specs,
                out_specs=out_spec),
            compiler_params=cparams,
        )(xT, w1c, b1c, w2c, b2c)
        return outT[:, :B].T                          # (B, OUT)

    gw1e, gb1, gw2, gb2 = gamma_params
    GHID = gw1e.shape[0]
    gw1c = gw1e.astype(input_dtype)                   # (GHID, IN)
    gb1c = gb1.reshape(GHID, 1).astype(jnp.float32)
    gw2c = gw2.reshape(1, GHID).astype(jnp.float32)
    gb2c = gb2.reshape(1, 1).astype(jnp.float32)
    g_specs = [
        pl.BlockSpec((GHID, IN), lambda i: (0, 0)),
        pl.BlockSpec((GHID, 1), lambda i: (0, 0)),
        pl.BlockSpec((1, GHID), lambda i: (0, 0)),
        pl.BlockSpec((1, 1), lambda i: (0, 0)),
    ]
    g_out_spec = pl.BlockSpec((1, tb), lambda i: (0, i))

    outT, gT = pl.pallas_call(
        mlp_exp_gamma_kernel,
        out_shape=(jax.ShapeDtypeStruct((OUT, Bp), jnp.float32),
                   jax.ShapeDtypeStruct((1, Bp), jnp.float32)),
        grid_spec=pltpu.PrefetchScalarGridSpec(
            num_scalar_prefetch=0,
            grid=grid,
            in_specs=[x_spec] + w_specs + g_specs,
            out_specs=(out_spec, g_out_spec)),
        compiler_params=cparams,
    )(xT, w1c, b1c, w2c, b2c, gw1c, gb1c, gw2c, gb2c)
    return outT[:, :B].T, gT[:, :B].T                 # (B, OUT), (B, 1)


# ----------------------------------------------------------------------------
# Deterministic parameter init (mimics nn.Linear default U(-1/sqrt(fan_in), ..))
# ----------------------------------------------------------------------------
def init_linear(key, out_features, in_features):
    kw, kb = jax.random.split(key)
    bound = 1.0 / math.sqrt(in_features)
    w = jax.random.uniform(kw, (out_features, in_features), jnp.float32,
                           -bound, bound)
    b = jax.random.uniform(kb, (out_features,), jnp.float32, -bound, bound)
    return w, b


def init_bdw_params(key, input_size, hidden=None, output_size=2,
                    gamma_type='constant', gamma_cols_idxs=None):
    hidden = input_size // 5 if hidden is None else hidden
    out_size = output_size + 1 if gamma_type == 'individual' else output_size
    k1, k2, k3, k4 = jax.random.split(key, 4)
    params = {}
    params['linear'] = init_linear(k1, hidden, input_size)
    params['out'] = init_linear(k2, out_size, hidden)
    if gamma_type == 'constant':
        params['log_gamma'] = jnp.zeros((1,), jnp.float32)
    elif gamma_type == 'partitioned':
        assert gamma_cols_idxs is not None
        g_in = gamma_cols_idxs.shape[0]
        params['gamma_l1'] = init_linear(k3, g_in // 2, g_in)
        params['gamma_l2'] = init_linear(k4, 1, g_in // 2)
    return params


# ----------------------------------------------------------------------------
# Forward pass (semantics match BdWRegression.forward)
# ----------------------------------------------------------------------------
def bdw_forward(params, x, gamma_type='constant', gamma_cols_idxs=None,
                tile_b=2048, input_dtype=jnp.bfloat16):
    w1, b1 = params['linear']
    w2, b2 = params['out']

    if gamma_type == 'constant':
        out = bdw_mlp(x, w1, b1, w2, b2, tile_b=tile_b, input_dtype=input_dtype)
        gamma = jnp.clip(jnp.exp(params['log_gamma'] + 1e-10), 0.0, 5.0)
        return out, gamma
    elif gamma_type == 'partitioned':
        gw1, gb1 = params['gamma_l1']
        gw2, gb2 = params['gamma_l2']
        IN = x.shape[1]
        # Scatter-expand the gamma first-layer weight onto the full feature axis
        # (one-time, tiny) so the gamma head fuses into the same kernel and
        # reuses the resident x tile — no second HBM pass / gather over x.
        gw1e = jnp.zeros((gw1.shape[0], IN), gw1.dtype).at[:, gamma_cols_idxs].set(gw1)
        out, gamma = bdw_mlp(x, w1, b1, w2, b2,
                             gamma_params=(gw1e, gb1, gw2, gb2),
                             tile_b=tile_b, input_dtype=input_dtype)
        return out, jnp.clip(gamma, 0.0, 5.0)
    else:  # 'individual'
        out = bdw_mlp(x, w1, b1, w2, b2, tile_b=tile_b, input_dtype=input_dtype)
        return out[:, :2], jnp.clip(out[:, -1], 0.0, 5.0)


# Pure-JAX reference (optionally emulating the kernel's input-dtype rounding).
def bdw_forward_ref(params, x, gamma_type='constant', gamma_cols_idxs=None,
                    input_dtype=jnp.float32):
    def rd(a):
        return a.astype(input_dtype).astype(jnp.float32)

    def silu(v):
        return v * jax.nn.sigmoid(v)

    w1, b1 = params['linear']
    w2, b2 = params['out']
    xr = rd(x)
    z = silu(xr @ rd(w1).T + b1)
    out = jnp.exp(z @ w2.T + b2)
    if gamma_type == 'constant':
        return out, jnp.clip(jnp.exp(params['log_gamma'] + 1e-10), 0.0, 5.0)
    elif gamma_type == 'partitioned':
        gi = xr[:, gamma_cols_idxs]
        gw1, gb1 = params['gamma_l1']
        gw2, gb2 = params['gamma_l2']
        g = silu(gi @ rd(gw1).T + gb1) @ gw2.T + gb2
        return out, jnp.clip(jnp.exp(g), 0.0, 5.0)
    else:
        return out[:, :2], jnp.clip(out[:, -1], 0.0, 5.0)


if __name__ == "__main__":
    key = jax.random.PRNGKey(0)
    kx, kp, kp2, kp3 = jax.random.split(key, 4)

    # Small but non-trivial: batch not a multiple of the 128-lane tile, so the
    # padding/multi-tile path (grid=(3,)) is exercised.
    batch, input_size, hidden = 300, 32, 16
    tile_b = 128
    dt = jnp.bfloat16
    x = jax.random.normal(kx, (batch, input_size), jnp.float32)

    tol = dict(atol=1e-2, rtol=1e-2)

    # --- constant gamma mode (module default) ---
    params_c = init_bdw_params(kp, input_size, hidden=hidden,
                               gamma_type='constant')
    out_c, gamma_c = bdw_forward(params_c, x, gamma_type='constant',
                                 tile_b=tile_b, input_dtype=dt)
    jax.block_until_ready((out_c, gamma_c))
    ref_out_c, ref_gamma_c = bdw_forward_ref(params_c, x, gamma_type='constant',
                                             input_dtype=dt)
    assert out_c.shape == (batch, 2)
    assert jnp.allclose(out_c, ref_out_c, **tol)
    assert jnp.allclose(gamma_c, ref_gamma_c, atol=1e-6)

    # --- partitioned gamma mode (non-contiguous gamma columns) ---
    gamma_cols = jnp.array([0, 3, 5, 7, 11, 13, 17, 19], dtype=jnp.int32)
    params_p = init_bdw_params(kp2, input_size, hidden=hidden,
                               gamma_type='partitioned',
                               gamma_cols_idxs=gamma_cols)
    out_p, gamma_p = bdw_forward(params_p, x, gamma_type='partitioned',
                                 gamma_cols_idxs=gamma_cols,
                                 tile_b=tile_b, input_dtype=dt)
    jax.block_until_ready((out_p, gamma_p))
    ref_out_p, ref_gamma_p = bdw_forward_ref(params_p, x,
                                             gamma_type='partitioned',
                                             gamma_cols_idxs=gamma_cols,
                                             input_dtype=dt)
    assert out_p.shape == (batch, 2) and gamma_p.shape == (batch, 1)
    assert jnp.allclose(out_p, ref_out_p, **tol)
    assert jnp.allclose(gamma_p, ref_gamma_p, **tol)

    # --- individual gamma mode ---
    params_i = init_bdw_params(kp3, input_size, hidden=hidden,
                               gamma_type='individual')
    out_i, gamma_i = bdw_forward(params_i, x, gamma_type='individual',
                                 tile_b=tile_b, input_dtype=dt)
    jax.block_until_ready((out_i, gamma_i))
    ref_out_i, ref_gamma_i = bdw_forward_ref(params_i, x,
                                             gamma_type='individual',
                                             input_dtype=dt)
    assert out_i.shape == (batch, 2) and gamma_i.shape == (batch,)
    assert jnp.allclose(out_i, ref_out_i, **tol)
    assert jnp.allclose(gamma_i, ref_gamma_i, **tol)

    print("KERNEL_OK")
</pallas_src>

<mosaic_0001>
module attributes {stable_mosaic.version = 11 : i64} {
  func.func @mlp_exp_kernel(%arg0: i32, %arg1: memref<32x128xbf16, #tpu.memory_space<vmem>>, %arg2: memref<16x32xbf16, #tpu.memory_space<vmem>>, %arg3: memref<16x1xf32, #tpu.memory_space<vmem>>, %arg4: memref<2x16xf32, #tpu.memory_space<vmem>>, %arg5: memref<2x1xf32, #tpu.memory_space<vmem>>, %arg6: memref<2x128xf32, #tpu.memory_space<vmem>>) attributes {dimension_semantics = [#tpu.dimension_semantics<parallel>], iteration_bounds = array<i64: 3>, scalar_prefetch = 0 : i64, scratch_operands = 0 : i64, tpu.core_type = #tpu.core_type<tc>, window_params = [{transform_indices = @transform_0, window_bounds = array<i64: 32, 128>}, {pipeline_mode = #tpu.pipeline_mode<synchronous>, transform_indices = @transform_1, window_bounds = array<i64: 16, 32>}, {pipeline_mode = #tpu.pipeline_mode<synchronous>, transform_indices = @transform_2, window_bounds = array<i64: 16, 1>}, {pipeline_mode = #tpu.pipeline_mode<synchronous>, transform_indices = @transform_3, window_bounds = array<i64: 2, 16>}, {pipeline_mode = #tpu.pipeline_mode<synchronous>, transform_indices = @transform_4, window_bounds = array<i64: 2, 1>}, {transform_indices = @transform_5, window_bounds = array<i64: 2, 128>}]} {
    %c0 = arith.constant 0 : index
    %c0_0 = arith.constant 0 : index
    %0 = vector.load %arg1[%c0, %c0_0] : memref<32x128xbf16, #tpu.memory_space<vmem>>, vector<32x128xbf16>
    %c0_1 = arith.constant 0 : index
    %c0_2 = arith.constant 0 : index
    %1 = vector.load %arg2[%c0_1, %c0_2] : memref<16x32xbf16, #tpu.memory_space<vmem>>, vector<16x32xbf16>
    %c0_3 = arith.constant 0 : index
    %c0_4 = arith.constant 0 : index
    %2 = vector.load %arg3[%c0_3, %c0_4] : memref<16x1xf32, #tpu.memory_space<vmem>>, vector<16x1xf32>
    %c0_5 = arith.constant 0 : index
    %c0_6 = arith.constant 0 : index
    %3 = vector.load %arg4[%c0_5, %c0_6] : memref<2x16xf32, #tpu.memory_space<vmem>>, vector<2x16xf32>
    %c0_7 = arith.constant 0 : index
    %c0_8 = arith.constant 0 : index
    %4 = vector.load %arg5[%c0_7, %c0_8] : memref<2x1xf32, #tpu.memory_space<vmem>>, vector<2x1xf32>
    %cst = arith.constant dense<0.000000e+00> : vector<16x128xf32>
    %5 = tpu.matmul %1, %0, %cst {dimension_numbers = #tpu.dot_dimension_numbers<[1], [0], [0], [1], [0, 0, 1, 1], [], []>} : vector<16x32xbf16>, vector<32x128xbf16>, vector<16x128xf32> -> vector<16x128xf32>
    %6 = vector.broadcast %2 : vector<16x1xf32> to vector<16x128xf32>
    %7 = arith.addf %5, %6 : vector<16x128xf32>
    %8 = arith.negf %7 : vector<16x128xf32>
    %9 = math.exp %8 : vector<16x128xf32>
    %cst_9 = arith.constant 1.000000e+00 : f32
    %10 = vector.broadcast %cst_9 : f32 to vector<16x128xf32>
    %11 = arith.addf %10, %9 : vector<16x128xf32>
    %12 = arith.divf %10, %11 : vector<16x128xf32>
    %13 = arith.mulf %7, %12 : vector<16x128xf32>
    %cst_10 = arith.constant dense<0.000000e+00> : vector<2x128xf32>
    %14 = tpu.matmul %3, %13, %cst_10 {dimension_numbers = #tpu.dot_dimension_numbers<[1], [0], [0], [1], [0, 0, 1, 1], [], []>} : vector<2x16xf32>, vector<16x128xf32>, vector<2x128xf32> -> vector<2x128xf32>
    %15 = vector.broadcast %4 : vector<2x1xf32> to vector<2x128xf32>
    %16 = arith.addf %14, %15 : vector<2x128xf32>
    %17 = math.exp %16 : vector<2x128xf32>
    %c0_11 = arith.constant 0 : index
    %c0_12 = arith.constant 0 : index
    %18 = vector.load %arg6[%c0_11, %c0_12] : memref<2x128xf32, #tpu.memory_space<vmem>>, vector<2x128xf32>
    tpu.vector_store %arg6[%c0_11, %c0_12], %17 {strides = array<i32>} : memref<2x128xf32, #tpu.memory_space<vmem>>, vector<2x128xf32>,
    return
  }
  func.func @transform_0(%arg0: i32) -> (i32, i32) {
    %c0_i32 = arith.constant 0 : i32
    %c0_i32_0 = arith.constant 0 : i32
    return %c0_i32, %arg0 : i32, i32
  }
  func.func @transform_1(%arg0: i32) -> (i32, i32) {
    %c0_i32 = arith.constant 0 : i32
    %c0_i32_0 = arith.constant 0 : i32
    %c0_i32_1 = arith.constant 0 : i32
    return %c0_i32, %c0_i32_0 : i32, i32
  }
  func.func @transform_2(%arg0: i32) -> (i32, i32) {
    %c0_i32 = arith.constant 0 : i32
    %c0_i32_0 = arith.constant 0 : i32
    %c0_i32_1 = arith.constant 0 : i32
    return %c0_i32, %c0_i32_0 : i32, i32
  }
  func.func @transform_3(%arg0: i32) -> (i32, i32) {
    %c0_i32 = arith.constant 0 : i32
    %c0_i32_0 = arith.constant 0 : i32
    %c0_i32_1 = arith.constant 0 : i32
    return %c0_i32, %c0_i32_0 : i32, i32
  }
  func.func @transform_4(%arg0: i32) -> (i32, i32) {
    %c0_i32 = arith.constant 0 : i32
    %c0_i32_0 = arith.constant 0 : i32
    %c0_i32_1 = arith.constant 0 : i32
    return %c0_i32, %c0_i32_0 : i32, i32
  }
  func.func @transform_5(%arg0: i32) -> (i32, i32) {
    %c0_i32 = arith.constant 0 : i32
    %c0_i32_0 = arith.constant 0 : i32
    return %c0_i32, %arg0 : i32, i32
  }
}

</mosaic_0001>

<llo_original>
// kernel: tpu_custom_call.1
$region0: #{tpu_custom_call.1}
  #allocation0 [shape = 'u32[]', space=smem, size = 0x4, offset = 0x4, fixed_abs, tag = 'smem constant byte address 0x4 - core index']
  #allocation1 [shape = 'u32[144,128]{1,0:T(1,128)}', space=vmem, size = 0x12000, scoped, tag = 'internal scratch']
  %s0 = inlined_call_operand.hbm [shape: bf16[32,384], index: 0, kind: input, shape index: {}]
  %s1 = inlined_call_operand.vmem [shape: bf16[16,32], index: 1, kind: input, shape index: {}]
  %s2 = inlined_call_operand.vmem [shape: f32[16,1], index: 2, kind: input, shape index: {}]
  %s3 = inlined_call_operand.vmem [shape: f32[2,16], index: 3, kind: input, shape index: {}]
  %s4 = inlined_call_operand.vmem [shape: f32[2,1], index: 4, kind: input, shape index: {}]
  %s5 = inlined_call_operand.hbm [shape: f32[2,384], index: 5, kind: output, shape index: {}]
  %s6 = sld [smem:[#allocation0]]
  $region57: #{tpu_custom_call.1} parent=0
    _
  %s8 = ssub.s32 1, %s6
  %s9 = scalar_select 0, %s8, %s6
  $region1: #{tpu_custom_call.1} parent=0
    #allocation2 [shape = 'u8[16384]{0}', space=vmem, size = 0x4000, scoped, tag = 'input window, operand 0']
    #allocation3 [shape = 's32[2]{0}', space=sflag, size = 0x8, scoped, tag = 'scoped memory for tpu_custom_call.1']
    #allocation4 [shape = 's32[2]{0}', space=sflag, size = 0x8, scoped, tag = 'scoped memory for tpu_custom_call.1']
    #allocation5 [shape = 'u8[2048]{0}', space=vmem, size = 0x800, scoped, tag = 'output window, operand 0']
    %10 = vsyncpa [#allocation3], 0
    %s11 = scalar_lea.sflag [#allocation3], 1
    %12 = vsyncpa %s11, 0
    %13 = vsyncpa [#allocation4], 0
    %s14 = scalar_lea.sflag [#allocation4], 1
    %15 = vsyncpa %s14, 0
    loop: start=0, step=1, limit=5
    $region2: #{tpu_custom_call.1} parent=1 // loop_pre_header
      _
    $region3: #{tpu_custom_call.1} parent=1 // loop_header
      %s17 = sphi 0, %s21
      %p18 = scmp.ge.s32.totalorder %s17, 5
      %s27 = sphi 0, %s29
      %s30 = sphi 0, %s27
      %s31 = sphi 0, %s30
      %s47 = sphi 0, %s31
      %s51 = sphi 0, %s51
      %s53 = sphi 0, %s51
      %s54 = sphi 0, %s53
      %s68 = sphi 0, %s54
      %s72 = sphi 0, %s72
      %s74 = sphi 0, %s72
      %s75 = sphi 0, %s74
      %s89 = sphi 0, %s75
      %s93 = sphi 0, %s93
      %s95 = sphi 0, %s93
      %s96 = sphi 0, %s95
      %s110 = sphi 0, %s96
      %s114 = sphi 0, %s114
      %s116 = sphi 0, %s114
      %s117 = sphi 0, %s116
      %s131 = sphi 0, %s117
      %s137 = sphi 0, %s139
      %s140 = sphi 0, %s137
      %s141 = sphi 0, %s140
      %s157 = sphi 0, %s141
    $region4: #{tpu_custom_call.1} parent=1 // loop_header_branch
      %20 = sbr.rel (%p18) target = $region8
    $region5: #{tpu_custom_call.1} parent=1 // loop_body
      %s22 = ssub.s32 %s17, 1
      %s23 = ssub.s32 %s17, 2
      %s24 = sadd.s32 %s17, 1
      %s25 = ssub.s32 %s17, %s24
      %p26 = scmp.eq.s32.totalorder %s25, 0
      %s28 = sadd.s32 %s27, 1
      %s29 = scalar_select %p26, %s27, %s28
      %p32 = pneg %p26
      %p33 = scmp.eq.s32.totalorder %s17, 2
      %p34 = por %p32, %p33
      %p35 = scmp.ne.s32.totalorder %s27, %s30
      %p36 = scmp.eq.s32.totalorder %s17, 0
      %p37 = por %p35, %p36
      %p38 = scmp.ne.s32.totalorder %s27, %s30
      %p39 = scmp.eq.s32.totalorder %s22, 2
      %p40 = por %p38, %p39
      %p41 = scmp.ne.s32.totalorder %s30, %s31
      %p42 = scmp.eq.s32.totalorder %s22, 0
      %p43 = por %p41, %p42
      %p44 = scmp.ne.s32.totalorder %s30, %s31
      %p45 = scmp.eq.s32.totalorder %s23, 2
      %p46 = por %p44, %p45
      %p48 = scmp.ne.s32.totalorder %s31, %s47
      %p49 = scmp.eq.s32.totalorder %s23, 0
      %p50 = por %p48, %p49
      %s52 = sadd.s32 %s51, 1
      %p55 = scmp.eq.s32.totalorder %s17, 2
      %p56 = scmp.ne.s32.totalorder %s51, %s53
      %p57 = scmp.eq.s32.totalorder %s17, 0
      %p58 = por %p56, %p57
      %p59 = scmp.ne.s32.totalorder %s51, %s53
      %p60 = scmp.eq.s32.totalorder %s22, 2
      %p61 = por %p59, %p60
      %p62 = scmp.ne.s32.totalorder %s53, %s54
      %p63 = scmp.eq.s32.totalorder %s22, 0
      %p64 = por %p62, %p63
      %p65 = scmp.ne.s32.totalorder %s53, %s54
      %p66 = scmp.eq.s32.totalorder %s23, 2
      %p67 = por %p65, %p66
      %p69 = scmp.ne.s32.totalorder %s54, %s68
      %p70 = scmp.eq.s32.totalorder %s23, 0
      %p71 = por %p69, %p70
      %s73 = sadd.s32 %s72, 1
      %p76 = scmp.eq.s32.totalorder %s17, 2
      %p77 = scmp.ne.s32.totalorder %s72, %s74
      %p78 = scmp.eq.s32.totalorder %s17, 0
      %p79 = por %p77, %p78
      %p80 = scmp.ne.s32.totalorder %s72, %s74
      %p81 = scmp.eq.s32.totalorder %s22, 2
      %p82 = por %p80, %p81
      %p83 = scmp.ne.s32.totalorder %s74, %s75
      %p84 = scmp.eq.s32.totalorder %s22, 0
      %p85 = por %p83, %p84
      %p86 = scmp.ne.s32.totalorder %s74, %s75
      %p87 = scmp.eq.s32.totalorder %s23, 2
      %p88 = por %p86, %p87
      %p90 = scmp.ne.s32.totalorder %s75, %s89
      %p91 = scmp.eq.s32.totalorder %s23, 0
      %p92 = por %p90, %p91
      %s94 = sadd.s32 %s93, 1
      %p97 = scmp.eq.s32.totalorder %s17, 2
      %p98 = scmp.ne.s32.totalorder %s93, %s95
      %p99 = scmp.eq.s32.totalorder %s17, 0
      %p100 = por %p98, %p99
      %p101 = scmp.ne.s32.totalorder %s93, %s95
      %p102 = scmp.eq.s32.totalorder %s22, 2
      %p103 = por %p101, %p102
      %p104 = scmp.ne.s32.totalorder %s95, %s96
      %p105 = scmp.eq.s32.totalorder %s22, 0
      %p106 = por %p104, %p105
      %p107 = scmp.ne.s32.totalorder %s95, %s96
      %p108 = scmp.eq.s32.totalorder %s23, 2
      %p109 = por %p107, %p108
      %p111 = scmp.ne.s32.totalorder %s96, %s110
      %p112 = scmp.eq.s32.totalorder %s23, 0
      %p113 = por %p111, %p112
      %s115 = sadd.s32 %s114, 1
      %p118 = scmp.eq.s32.totalorder %s17, 2
      %p119 = scmp.ne.s32.totalorder %s114, %s116
      %p120 = scmp.eq.s32.totalorder %s17, 0
      %p121 = por %p119, %p120
      %p122 = scmp.ne.s32.totalorder %s114, %s116
      %p123 = scmp.eq.s32.totalorder %s22, 2
      %p124 = por %p122, %p123
      %p125 = scmp.ne.s32.totalorder %s116, %s117
      %p126 = scmp.eq.s32.totalorder %s22, 0
      %p127 = por %p125, %p126
      %p128 = scmp.ne.s32.totalorder %s116, %s117
      %p129 = scmp.eq.s32.totalorder %s23, 2
      %p130 = por %p128, %p129
      %p132 = scmp.ne.s32.totalorder %s117, %s131
      %p133 = scmp.eq.s32.totalorder %s23, 0
      %p134 = por %p132, %p133
      %s135 = ssub.s32 %s17, %s24
      %p136 = scmp.eq.s32.totalorder %s135, 0
      %s138 = sadd.s32 %s137, 1
      %s139 = scalar_select %p136, %s137, %s138
      %p142 = pneg %p136
      %p143 = scmp.eq.s32.totalorder %s17, 2
      %p144 = por %p142, %p143
      %p145 = scmp.ne.s32.totalorder %s137, %s140
      %p146 = scmp.eq.s32.totalorder %s17, 0
      %p147 = por %p145, %p146
      %p148 = scmp.ne.s32.totalorder %s137, %s140
      %p149 = scmp.eq.s32.totalorder %s22, 2
      %p150 = por %p148, %p149
      %p151 = scmp.ne.s32.totalorder %s140, %s141
      %p152 = scmp.eq.s32.totalorder %s22, 0
      %p153 = por %p151, %p152
      %p154 = scmp.ne.s32.totalorder %s140, %s141
      %p155 = scmp.eq.s32.totalorder %s23, 2
      %p156 = por %p154, %p155
      %p158 = scmp.ne.s32.totalorder %s141, %s157
      %p159 = scmp.eq.s32.totalorder %s23, 0
      %p160 = por %p158, %p159
      %p161 = scmp.le.s32.totalorder 1, %s17
      %p162 = scmp.lt.s32.totalorder %s17, 4
      %p163 = pnand %p161, %p162
      %p164 = pneg %p163
      // Predicated region
      $region9: #{tpu_custom_call.1} parent=5 // pred_check
        _
      $region10: #{tpu_custom_call.1} parent=5 // pred_check_branch
        %166 = sbr.rel (%p163) target = $region12
      $region11: #{tpu_custom_call.1} parent=5 // pred_region
        %s167 = ssub.s32 %s17, 1
        // Predicated region
        $region13: #{tpu_custom_call.1} parent=11 // pred_check
          %p168 = pneg %p64
        $region14: #{tpu_custom_call.1} parent=11 // pred_check_branch
          %170 = sbr.rel (%p168) target = $region16
        $region15: #{tpu_custom_call.1} parent=11 // pred_region
          _
        $region16: #{tpu_custom_call.1} parent=11 // pred_fallthru
          _
        // Predicated region
        $region17: #{tpu_custom_call.1} parent=11 // pred_check
          %p171 = pneg %p85
        $region18: #{tpu_custom_call.1} parent=11 // pred_check_branch
          %173 = sbr.rel (%p171) target = $region20
        $region19: #{tpu_custom_call.1} parent=11 // pred_region
          _
        $region20: #{tpu_custom_call.1} parent=11 // pred_fallthru
          _
        // Predicated region
        $region21: #{tpu_custom_call.1} parent=11 // pred_check
          %p174 = pneg %p106
        $region22: #{tpu_custom_call.1} parent=11 // pred_check_branch
          %176 = sbr.rel (%p174) target = $region24
        $region23: #{tpu_custom_call.1} parent=11 // pred_region
          _
        $region24: #{tpu_custom_call.1} parent=11 // pred_fallthru
          _
        // Predicated region
        $region25: #{tpu_custom_call.1} parent=11 // pred_check
          %p177 = pneg %p127
        $region26: #{tpu_custom_call.1} parent=11 // pred_check_branch
          %179 = sbr.rel (%p177) target = $region28
        $region27: #{tpu_custom_call.1} parent=11 // pred_region
          _
        $region28: #{tpu_custom_call.1} parent=11 // pred_fallthru
          _
      $region12: #{tpu_custom_call.1} parent=5 // pred_fallthru
        _
      %p180 = scmp.lt.s32.totalorder %s17, 3
      // Predicated region
      $region29: #{tpu_custom_call.1} parent=5 // pred_check
        %p181 = pneg %p180
      $region30: #{tpu_custom_call.1} parent=5 // pred_check_branch
        %183 = sbr.rel (%p181) target = $region32
      $region31: #{tpu_custom_call.1} parent=5 // pred_region
        // Predicated region
        $region33: #{tpu_custom_call.1} parent=31 // pred_check
          %p184 = pneg %p37
        $region34: #{tpu_custom_call.1} parent=31 // pred_check_branch
          %186 = sbr.rel (%p184) target = $region36
        $region35: #{tpu_custom_call.1} parent=31 // pred_region
          %s187 = sand.u32 %s27, 1
          %s188 = scalar_lea.sflag [#allocation3], %s187
          %s189 = sand.u32 %s27, 1
          %s190 = smul.addr %s189, 16
          %s191 = scalar_lea.vmem [#allocation2], %s190
          %s193 = ssub.s32 256, 256
          %194 = vsyncadd %s188, %s193
          %s195 = smul.addr %s17, 64
          %s196 = scalar_lea.hbm %s0, %s195
          %s197 = sshll.u32 %s191, 4
          %s198 = int_to_ptr.vmem [resolvable:$true] %s197
          %203 = dma.hbm_to_vmem [thread:$0]  %s196, 256, %s198, %s188, 192, 64, 4
        $region36: #{tpu_custom_call.1} parent=31 // pred_fallthru
          _
      $region32: #{tpu_custom_call.1} parent=5 // pred_fallthru
        _
      %p204 = scmp.le.s32.totalorder 1, %s17
      %p205 = scmp.lt.s32.totalorder %s17, 4
      %p206 = pnand %p204, %p205
      %p207 = pneg %p206
      // Predicated region
      $region37: #{tpu_custom_call.1} parent=5 // pred_check
        _
      $region38: #{tpu_custom_call.1} parent=5 // pred_check_branch
        %209 = sbr.rel (%p206) target = $region40
      $region39: #{tpu_custom_call.1} parent=5 // pred_region
        %s210 = ssub.s32 %s17, 1
        %s211 = sand.u32 %s30, 1
        %s212 = scalar_lea.sflag [#allocation3], %s211
        %s213 = sand.u32 %s30, 1
        %s214 = smul.addr %s213, 16
        %s215 = scalar_lea.vmem [#allocation2], %s214
        // Predicated region
        $region41: #{tpu_custom_call.1} parent=39 // pred_check
          %p216 = pneg %p43
        $region42: #{tpu_custom_call.1} parent=39 // pred_check_branch
          %218 = sbr.rel (%p216) target = $region44
        $region43: #{tpu_custom_call.1} parent=39 // pred_region
          %219 = dma.done %s212, 256
        $region44: #{tpu_custom_call.1} parent=39 // pred_fallthru
          _
        %s220 = sand.u32 %s30, 1
        %s221 = scalar_lea.sflag [#allocation3], %s220
        %s222 = sand.u32 %s30, 1
        %s223 = smul.addr %s222, 16
        %s224 = scalar_lea.vmem [#allocation2], %s223
        %p225 = pneg %p43
        %p226 = pneg %p40
        %p227 = pneg %p64
        %p228 = pneg %p61
        %p229 = pneg %p85
        %p230 = pneg %p82
        %p231 = pneg %p106
        %p232 = pneg %p103
        %p233 = pneg %p127
        %p234 = pneg %p124
        %p235 = pneg %p153
        %p236 = pneg %p150
        %s237 = sand.u32 %s140, 1
        %s238 = scalar_lea.sflag [#allocation4], %s237
        %s239 = sand.u32 %s140, 1
        %s240 = smul.addr %s239, 2
        %s241 = scalar_lea.vmem [#allocation5], %s240
        %v243 = vld [vmem:[%s215] sm:$0xf]
        %v244 = vld [vmem:[%s215 + $0x4] sm:$0xf]
        %v245 = vld [vmem:[%s215 + $0x8] sm:$0xf]
        %v246 = vld [vmem:[%s215 + $0xc] sm:$0xf]
        %v247 = vld [vmem:[%s1] sm:$0xf]
        %v248 = vld [vmem:[%s1 + $0x4] sm:$0xf]
        %v249 = vld [vmem:[%s2] sm:$0xff]
        %v250 = vld [vmem:[%s2 + $0x8] sm:$0xff]
        %v251 = vld [vmem:[%s3] sm:$0x3]
        %v252 = vld [vmem:[%s4] sm:$0x3]
        %254 = vset.pattern.permute.xlu0 0
        %255 = vperm.xlu0 %254, %v249
        %v256 = vpop.permute.xlu0 %255
        %259 = vset.pattern.permute.xlu0 0
        %260 = vperm.xlu0 %259, %v250
        %v261 = vpop.permute.xlu0 %260
        %v265 = vunpack.c.l.b16 %v247
        %v266 = vunpack.c.l.b16 %v248
        %v267 = vpack.c.b16 %v266, %v265
        %v272 = vunpack.c.l.b16 %v243
        %v273 = vunpack.c.l.b16 %v244
        %v274 = vunpack.c.l.b16 %v245
        %v275 = vunpack.c.l.b16 %v246
        %v276 = vpack.c.b16 %v273, %v272
        %v277 = vpack.c.b16 %v275, %v274
        %vm280 = vcmask 261120
        %v282 = vsel %vm280, %v267, 0
        %284 = vmatprep.subr.bf16.mxu0 0
        %285 = vmatpush1.bf16.msra.mxu0 0
        %286 = vmatprep.subr.bf16.mxu0 0
        %287 = vmatpush1.bf16.msra.mxu0 0
        %288 = vmatprep.subr.bf16.mxu0 0
        %289 = vmatpush1.bf16.msra.mxu0 0
        %290 = vmatprep.subr.bf16.mxu0 0
        %291 = vmatpush1.bf16.msra.mxu0 0
        %292 = vmatprep.subr.bf16.mxu0 0
        %293 = vmatpush1.bf16.msra.mxu0 0
        %294 = vmatprep.subr.bf16.mxu0 0
        %295 = vmatpush1.bf16.msra.mxu0 0
        %296 = vmatprep.subr.bf16.mxu0 0
        %297 = vmatpush1.bf16.msra.mxu0 %v277
        %298 = vmatprep.subr.bf16.mxu0 0
        %299 = vmatpush1.bf16.msra.mxu0 %v276
        %300 = vmatprep.subr.bf16.mxu0 0
        %301 = vmatpush2.bf16.msra.mxu0 0
        %302 = vmatprep.subr.bf16.mxu0 0
        %303 = vmatpush2.bf16.msra.mxu0 0
        %304 = vmatprep.subr.bf16.mxu0 0
        %305 = vmatpush2.bf16.msra.mxu0 0
        %306 = vmatprep.subr.bf16.mxu0 0
        %307 = vmatpush2.bf16.msra.mxu0 0
        %308 = vmatprep.subr.bf16.mxu0 0
        %309 = vmatpush2.bf16.msra.mxu0 0
        %310 = vmatprep.subr.bf16.mxu0 0
        %311 = vmatpush2.bf16.msra.mxu0 0
        %312 = vmatprep.subr.bf16.mxu0 0
        %313 = vmatpush2.bf16.msra.mxu0 0
        %314 = vmatprep.subr.bf16.mxu0 0
        %315 = vmatpush2.bf16.msra.mxu0 0
        %316 = vmatprep.mubr.bf16.mxu0 0
        %317 = vmatmul.mubr.bf16.gmra.mxu0 %v282
        %v318 = vpop.f32.mrf.mxu0
        %v319 = vadd.f32 %v256, %v318
        %v320 = vpop.f32.mrf.mxu0
        %v321 = vpop.f32.mrf.mxu0
        %v322 = vadd.f32 %v261, %v321
        %v323 = vpop.f32.mrf.mxu0
        %324 = vdwg.mxu0
        %v325 = vxor.u32 %v319, 2147483648
        %v326 = vxor.u32 %v322, 2147483648
        %v327 = vmul.f32 %v325, 1.442695
        %v328 = vpow.pop %v327
        %v329 = vmul.f32 %v326, 1.442695
        %v330 = vpow.pop %v329
        %v331 = vadd.f32 %v328, 1.0
        %v332 = vadd.f32 %v330, 1.0
        %v333 = vrcp.pop %v331
        %v334 = vmul.f32 1.0, %v333
        %v335 = vrcp.pop %v332
        %v336 = vmul.f32 1.0, %v335
        %v337 = vmul.f32 %v319, %v334
        %v338 = vmul.f32 %v322, %v336
        %340 = vset.pattern.permute.xlu0 0
        %341 = vperm.xlu0 %340, %v252
        %v342 = vpop.permute.xlu0 %341
        %vm344 = vcmask 130048
        %v346 = vsel %vm344, %v251, 0
        %348 = vmatprep.subr.mxu0 0.0
        %349 = vmatpush1.msra.mxu0 0.0
        %350 = vmatprep.subr.mxu0 0.0
        %351 = vmatpush1.msra.mxu0 0.0
        %352 = vmatprep.subr.mxu0 0.0
        %353 = vmatpush1.msra.mxu0 0.0
        %354 = vmatprep.subr.mxu0 0.0
        %355 = vmatpush1.msra.mxu0 0.0
        %356 = vmatprep.subr.mxu0 0.0
        %357 = vmatpush1.msra.mxu0 0.0
        %358 = vmatprep.subr.mxu0 0.0
        %359 = vmatpush1.msra.mxu0 0.0
        %360 = vmatprep.subr.mxu0 0.0
        %361 = vmatpush1.msra.mxu0 0.0
        %362 = vmatprep.subr.mxu0 0.0
        %363 = vmatpush1.msra.mxu0 0.0
        %364 = vmatprep.subr.mxu0 0.0
        %365 = vmatpush1.msra.mxu0 0.0
        %366 = vmatprep.subr.mxu0 0.0
        %367 = vmatpush1.msra.mxu0 0.0
        %368 = vmatprep.subr.mxu0 0.0
        %369 = vmatpush1.msra.mxu0 0.0
        %370 = vmatprep.subr.mxu0 0.0
        %371 = vmatpush1.msra.mxu0 0.0
        %372 = vmatprep.subr.mxu0 0.0
        %373 = vmatpush1.msra.mxu0 0.0
        %374 = vmatprep.subr.mxu0 0.0
        %375 = vmatpush1.msra.mxu0 0.0
        %376 = vmatprep.subr.mxu0 0.0
        %377 = vmatpush1.msra.mxu0 %v338
        %378 = vmatprep.subr.mxu0 0.0
        %379 = vmatpush1.msra.mxu0 %v337
        %380 = vmatprep.subr.mxu0 0.0
        %381 = vmatpush2.msra.mxu0 0.0
        %382 = vmatprep.subr.mxu0 0.0
        %383 = vmatpush2.msra.mxu0 0.0
        %384 = vmatprep.subr.mxu0 0.0
        %385 = vmatpush2.msra.mxu0 0.0
        %386 = vmatprep.subr.mxu0 0.0
        %387 = vmatpush2.msra.mxu0 0.0
        %388 = vmatprep.subr.mxu0 0.0
        %389 = vmatpush2.msra.mxu0 0.0
        %390 = vmatprep.subr.mxu0 0.0
        %391 = vmatpush2.msra.mxu0 0.0
        %392 = vmatprep.subr.mxu0 0.0
        %393 = vmatpush2.msra.mxu0 0.0
        %394 = vmatprep.subr.mxu0 0.0
        %395 = vmatpush2.msra.mxu0 0.0
        %396 = vmatprep.subr.mxu0 0.0
        %397 = vmatpush2.msra.mxu0 0.0
        %398 = vmatprep.subr.mxu0 0.0
        %399 = vmatpush2.msra.mxu0 0.0
        %400 = vmatprep.subr.mxu0 0.0
        %401 = vmatpush2.msra.mxu0 0.0
        %402 = vmatprep.subr.mxu0 0.0
        %403 = vmatpush2.msra.mxu0 0.0
        %404 = vmatprep.subr.mxu0 0.0
        %405 = vmatpush2.msra.mxu0 0.0
        %406 = vmatprep.subr.mxu0 0.0
        %407 = vmatpush2.msra.mxu0 0.0
        %408 = vmatprep.subr.mxu0 0.0
        %409 = vmatpush2.msra.mxu0 0.0
        %410 = vmatprep.subr.mxu0 0.0
        %411 = vmatpush2.msra.mxu0 0.0
        %412 = vmatprep.mubr.f32.mxu0 0.0
        %413 = vmatmul.mubr.f32.gmra.mxu0 %v346
        %v414 = vpop.f32.mrf.mxu0
        %v415 = vadd.f32 %v342, %v414
        %v416 = vpop.f32.mrf.mxu0
        %417 = vdwg.mxu0
        %v418 = vmul.f32 %v415, 1.442695
        %v419 = vpow.pop %v418
        %420 = vst [vmem:[%s241] sm:$0x3] %v419
        %s421 = sand.u32 %s140, 1
        %s422 = scalar_lea.sflag [#allocation4], %s421
        %s423 = sand.u32 %s140, 1
        %s424 = smul.addr %s423, 2
        %s425 = scalar_lea.vmem [#allocation5], %s424
        // Predicated region
        $region45: #{tpu_custom_call.1} parent=39 // pred_check
          %p426 = pneg %p150
        $region46: #{tpu_custom_call.1} parent=39 // pred_check_branch
          %428 = sbr.rel (%p426) target = $region48
        $region47: #{tpu_custom_call.1} parent=39 // pred_region
          %s430 = ssub.s32 32, 32
          %431 = vsyncadd %s422, %s430
          %s432 = smul.addr %s22, 32
          %s433 = scalar_lea.hbm %s5, %s432
          %s435 = sshll.u32 %s425, 4
          %s436 = int_to_ptr.vmem [resolvable:$true] %s435
          %438 = dma.vmem_to_hbm [thread:$0]  %s436, 32, %s433, %s422
        $region48: #{tpu_custom_call.1} parent=39 // pred_fallthru
          _
      $region40: #{tpu_custom_call.1} parent=5 // pred_fallthru
        _
      %p439 = scmp.le.s32.totalorder 2, %s17
      // Predicated region
      $region49: #{tpu_custom_call.1} parent=5 // pred_check
        %p440 = pneg %p439
      $region50: #{tpu_custom_call.1} parent=5 // pred_check_branch
        %442 = sbr.rel (%p440) target = $region52
      $region51: #{tpu_custom_call.1} parent=5 // pred_region
        %s443 = ssub.s32 %s17, 2
        // Predicated region
        $region53: #{tpu_custom_call.1} parent=51 // pred_check
          %p444 = pneg %p156
        $region54: #{tpu_custom_call.1} parent=51 // pred_check_branch
          %446 = sbr.rel (%p444) target = $region56
        $region55: #{tpu_custom_call.1} parent=51 // pred_region
          %s447 = sand.u32 %s141, 1
          %s448 = scalar_lea.sflag [#allocation4], %s447
          %s449 = sand.u32 %s141, 1
          %s450 = smul.addr %s449, 2
          %s451 = scalar_lea.vmem [#allocation5], %s450
          %452 = dma.done %s448, 32
        $region56: #{tpu_custom_call.1} parent=51 // pred_fallthru
          _
      $region52: #{tpu_custom_call.1} parent=5 // pred_fallthru
        _
    $region6: #{tpu_custom_call.1} parent=1 // loop_footer
      %s21 = sadd.s32 1, %s17
    $region7: #{tpu_custom_call.1} parent=1 // loop_footer_branch
      %16 = sbr.rel target = $region3
    $region8: #{tpu_custom_call.1} parent=1 // loop_exit
      _
    %453 = vsyncpa [#allocation3], 1
    %s454 = scalar_lea.sflag [#allocation3], 1
    %455 = vsyncpa %s454, 1
    %456 = vsyncpa [#allocation4], 1
    %s457 = scalar_lea.sflag [#allocation4], 1
    %458 = vsyncpa %s457, 1

</llo_original>
